<compile_context>
chip_gen: v7x
topology: tpu7x:2x2x1
jax: 0.10.0
libtpu: 0.0.40
codegen_flags: <defaults>
</compile_context>

<pallas_src>
import functools

import jax
import jax.numpy as jnp
from jax import lax
from jax.experimental import pallas as pl
from jax.experimental.pallas import tpu as pltpu

# ----------------------------- config --------------------------------------
PATCH = 16          # ViT patch size (like vit_base_patch16)
EMBED_DIM = 32      # mini ViT embed dim (768 in the real backbone)
NUM_HEADS = 4
DEPTH = 1
MLP_RATIO = 4
FUSION_HIDDEN = 512  # hard-coded in GroundEncoder.fusion_mlp
FEATURE_DIM = 16     # config['feature_dim']
IMG_NORM = 224       # project_points hard-codes (224, 224)
LN_EPS = 1e-6        # timm ViT LayerNorm eps


def _num_parallel_blocks(b):
    # 2-way "parallel" leading grid axis so the second TensorCore is used on
    # v7x megacore; on single-TC chips the extra step is one ~0.35us hop.
    return 2 if (b % 2 == 0 and b > 2) else 1


# ----------------------------- tiled linear kernel --------------------------
def _linear_kernel(x_ref, w_ref, b_ref, o_ref, *, act):
    y = jnp.dot(x_ref[...], w_ref[...], preferred_element_type=jnp.float32)
    y = y + b_ref[...]
    if act == "relu":
        y = jnp.maximum(y, 0.0)
    elif act == "gelu":
        # TODO(synk): timm uses exact erf-GELU; tanh-approx used for robust
        # Mosaic lowering (difference ~1e-3).
        y = jax.nn.gelu(y, approximate=True)
    o_ref[...] = y.astype(o_ref.dtype)


def pallas_linear(x, w, b, act="none", block_rows=512):
    M, K = x.shape
    _, N = w.shape
    tm = M if M <= block_rows else block_rows
    kernel = functools.partial(_linear_kernel, act=act)
    flops = 2 * M * K * N
    trans = M * N if act == "gelu" else 0
    bytes_accessed = 4 * (M * K + K * N + N + M * N)
    return pl.pallas_call(
        kernel,
        out_shape=jax.ShapeDtypeStruct((M, N), jnp.float32),
        grid=(pl.cdiv(M, tm),),
        in_specs=[pl.BlockSpec((tm, K), lambda i: (i, 0)),
                  pl.BlockSpec((K, N), lambda i: (0, 0)),
                  pl.BlockSpec((1, N), lambda i: (0, 0))],
        out_specs=pl.BlockSpec((tm, N), lambda i: (i, 0)),
        compiler_params=pltpu.CompilerParams(dimension_semantics=("parallel",)),
        cost_estimate=pl.CostEstimate(flops=flops, transcendentals=trans,
                                      bytes_accessed=bytes_accessed),
    )(x, w, b.reshape(1, N))


# ----------------------------- fused ViT block kernel -----------------------
def _vit_block_kernel(*refs, nh, final_norm):
    if final_norm:
        (x_ref, ln1g, ln1b, qkvw, qkvb, projw, projb,
         ln2g, ln2b, fc1w, fc1b, fc2w, fc2b, ng, nbt, o_ref) = refs
    else:
        (x_ref, ln1g, ln1b, qkvw, qkvb, projw, projb,
         ln2g, ln2b, fc1w, fc1b, fc2w, fc2b, o_ref) = refs

    x = x_ref[...]                                   # (bb, T, D)
    bb, T, D = x.shape
    dh = D // nh
    scale = float(dh) ** -0.5

    def ln(v, g, b):
        mu = jnp.mean(v, axis=-1, keepdims=True)
        var = jnp.mean(jnp.square(v - mu), axis=-1, keepdims=True)
        return (v - mu) * lax.rsqrt(var + LN_EPS) * g + b

    def bmm(a, w):
        # (bb, M, K) x (K, N) -> (bb, M, N).  The weight is broadcast over the
        # batch so the contraction stays in the leading-batch 'bqk,bkd->bqd'
        # dot_general form Mosaic lowers robustly (no multi-free-dim
        # dot_general, no lane-dim reshapes).  Weights are tiny at these dims;
        # at production dims cast to bf16 / keep 2-D and tile instead.
        wb = jnp.broadcast_to(w[None], (a.shape[0],) + w.shape)
        return lax.dot_general(a, wb, (((2,), (1,)), ((0,), (0,))),
                               preferred_element_type=jnp.float32)

    # --- attention branch (pre-norm) ----------------------------------------
    h = ln(x, ln1g[...], ln1b[...])
    qkv = bmm(h, qkvw[...]) + qkvb[...]              # (bb, T, 3D), one dense MXU pass
    pw = projw[...]
    att = None
    for hd in range(nh):                             # static, unrolled
        # TODO(synk): per-head lane slices remain; batching heads into one
        # dot_general needs a lane-dim (D -> nh, dh) reshape that Mosaic does
        # not relayout robustly.  The head-merge concat and the separate proj
        # matmul are removed by folding the projection into this loop.
        q = qkv[..., hd * dh:(hd + 1) * dh] * scale
        k = qkv[..., D + hd * dh:D + (hd + 1) * dh]
        v = qkv[..., 2 * D + hd * dh:2 * D + (hd + 1) * dh]
        s = lax.dot_general(q, k, (((2,), (2,)), ((0,), (0,))),
                            preferred_element_type=jnp.float32)   # (bb, T, T)
        s = s - jnp.max(s, axis=-1, keepdims=True)
        e = jnp.exp(s)
        p = e * pl.reciprocal(jnp.sum(e, axis=-1, keepdims=True), approx=True)
        o = lax.dot_general(p, v, (((2,), (1,)), ((0,), (0,))),
                            preferred_element_type=jnp.float32)   # (bb, T, dh)
        part = bmm(o, pw[hd * dh:(hd + 1) * dh, :])                # (bb, T, D)
        att = part if att is None else att + part
    x = x + att + projb[...]

    # --- MLP branch (pre-norm) ----------------------------------------------
    h2 = ln(x, ln2g[...], ln2b[...])
    h2 = jax.nn.gelu(bmm(h2, fc1w[...]) + fc1b[...], approximate=True)
    x = x + bmm(h2, fc2w[...]) + fc2b[...]

    if final_norm:
        x = ln(x, ng[...], nbt[...])
    o_ref[...] = x.astype(o_ref.dtype)


def pallas_vit_block(bp, x, norm_g, norm_b, final_norm):
    B, T, D = x.shape
    nb = _num_parallel_blocks(B)
    bb = B // nb
    r = lambda a: a.reshape(1, -1)
    inputs = [x,
              r(bp["ln1_g"]), r(bp["ln1_b"]),
              bp["qkv_w"], r(bp["qkv_b"]),
              bp["proj_w"], r(bp["proj_b"]),
              r(bp["ln2_g"]), r(bp["ln2_b"]),
              bp["fc1_w"], r(bp["fc1_b"]),
              bp["fc2_w"], r(bp["fc2_b"])]
    if final_norm:
        inputs += [r(norm_g), r(norm_b)]   # not passed (or DMA'd) otherwise

    def const(a):
        return pl.BlockSpec(a.shape, lambda i: (0,) * a.ndim)

    in_specs = ([pl.BlockSpec((bb, T, D), lambda i: (i, 0, 0))] +
                [const(a) for a in inputs[1:]])
    kernel = functools.partial(_vit_block_kernel, nh=NUM_HEADS,
                               final_norm=final_norm)

    mlp_dim = bp["fc1_w"].shape[1]
    flops = (2 * B * T * D * 3 * D + 4 * B * T * T * D + 2 * B * T * D * D
             + 4 * B * T * D * mlp_dim)
    trans = B * NUM_HEADS * T * T + B * T * mlp_dim
    wbytes = sum(int(a.size) for a in inputs[1:]) * 4
    bytes_accessed = 8 * B * T * D + wbytes

    # TODO(synk): at production dims (D=768, MLP=3072) set
    # vmem_limit_bytes / single-buffer the resident weights and cast matmul
    # operands to bf16 (v7x has 64 MiB VMEM, 32 MiB default scoped).
    return pl.pallas_call(
        kernel,
        out_shape=jax.ShapeDtypeStruct((B, T, D), jnp.float32),
        grid=(nb,),
        in_specs=in_specs,
        out_specs=pl.BlockSpec((bb, T, D), lambda i: (i, 0, 0)),
        compiler_params=pltpu.CompilerParams(dimension_semantics=("parallel",)),
        cost_estimate=pl.CostEstimate(flops=flops, transcendentals=trans,
                                      bytes_accessed=bytes_accessed),
    )(*inputs)


# --------------- fused multi-view combine + fusion MLP + Z max-pool ----------
def _fuse_mlp_pool_kernel(gw_ref, fc1w, fc1b, fc2w, fc2b, o_ref, *, n_src):
    # gw_ref: (bb, n_src, Z, XY, C) pre-weighted corner/view features
    # (bilinear * in-bounds * visibility / mask-sum folded in the wrapper, so
    # the combine is a plain accumulation -- no width-1 lane slices here).
    bb, _, Z, XY, C = gw_ref.shape
    cf = fc2w.shape[1]

    fused = gw_ref[:, 0]
    for j in range(1, n_src):                        # static small loop (V*4)
        fused = fused + gw_ref[:, j]                 # (bb, Z, XY, C)

    # fusion MLP once at M = bb*Z*XY rows (leading-dim reshape; XY % 8 == 0)
    h = fused.reshape(bb * Z * XY, C)
    h = jnp.dot(h, fc1w[...], preferred_element_type=jnp.float32) + fc1b[...]
    h = jnp.maximum(h, 0.0)
    out = jnp.dot(h, fc2w[...], preferred_element_type=jnp.float32) + fc2b[...]
    out = out.reshape(bb, Z, XY, cf)

    # vertical (Z) max-pool before the single store
    pooled = out[:, 0]
    for z in range(1, Z):
        pooled = jnp.maximum(pooled, out[:, z])
    # TODO(synk): at production XY the store should be lane-dense (emit
    # (bb, cf, XY) or flatten XY*cf); kept (bb, XY, cf) since XY = cf = 16 here.
    o_ref[...] = pooled.astype(o_ref.dtype)


def pallas_fuse_mlp_pool(gw, fc1_w, fc1_b, fc2_w, fc2_b):
    # gw: (B, n_src, Z, XY, C) pre-weighted features; output (B, XY, Cf)
    B, n_src, Z, XY, C = gw.shape
    hid = fc1_w.shape[1]
    Cf = fc2_w.shape[1]
    nb = _num_parallel_blocks(B)
    bb = B // nb
    kernel = functools.partial(_fuse_mlp_pool_kernel, n_src=n_src)

    M = B * Z * XY
    flops = M * n_src * C + 2 * M * C * hid + 2 * M * hid * Cf
    bytes_accessed = int(4 * (gw.size + C * hid + hid + hid * Cf + Cf
                              + B * XY * Cf))
    return pl.pallas_call(
        kernel,
        out_shape=jax.ShapeDtypeStruct((B, XY, Cf), jnp.float32),
        grid=(nb,),
        in_specs=[
            pl.BlockSpec((bb, n_src, Z, XY, C), lambda i: (i, 0, 0, 0, 0)),
            pl.BlockSpec((C, hid), lambda i: (0, 0)),
            pl.BlockSpec((1, hid), lambda i: (0, 0)),
            pl.BlockSpec((hid, Cf), lambda i: (0, 0)),
            pl.BlockSpec((1, Cf), lambda i: (0, 0)),
        ],
        out_specs=pl.BlockSpec((bb, XY, Cf), lambda i: (i, 0, 0)),
        compiler_params=pltpu.CompilerParams(dimension_semantics=("parallel",)),
        cost_estimate=pl.CostEstimate(flops=flops, transcendentals=0,
                                      bytes_accessed=bytes_accessed),
    )(gw, fc1_w, fc1_b.reshape(1, -1), fc2_w, fc2_b.reshape(1, -1))


# ----------------------------- mini ViT -------------------------------------
def vit_forward(vp, imgs):
    # imgs: (B, 3, H, W) NCHW.  Returns token sequence (B, 1+N, D).
    B, C, H, W = imgs.shape
    p = PATCH
    Hf, Wf = H // p, W // p
    # patch extraction == stride-p conv unrolled to a matmul (c, ph, pw order)
    patches = imgs.reshape(B, C, Hf, p, Wf, p).transpose(0, 2, 4, 1, 3, 5)
    patches = patches.reshape(B * Hf * Wf, C * p * p)
    tok = pallas_linear(patches, vp["patch_w"], vp["patch_b"])        # (B*N, D)
    D = tok.shape[-1]
    tok = tok.reshape(B, Hf * Wf, D)
    cls = jnp.broadcast_to(vp["cls"], (B, 1, D))
    x = jnp.concatenate([cls, tok], axis=1) + vp["pos"]
    for li, bp in enumerate(vp["blocks"]):
        final = li == len(vp["blocks"]) - 1
        x = pallas_vit_block(bp, x, vp["norm_g"], vp["norm_b"], final_norm=final)
    return x


# ----------------------------- projection / gather glue ---------------------
def project_points(points_3d, poses_w2c, intrinsics):
    B = points_3d.shape[0]
    pts = points_3d.reshape(B, -1, 3)
    hom = jnp.concatenate([pts, jnp.ones(pts.shape[:-1] + (1,), pts.dtype)], axis=-1)
    cam = jnp.einsum("bvij,bpj->bvpi", poses_w2c, hom)
    img = jnp.einsum("bvij,bvpj->bvpi", intrinsics, cam[..., :3])
    depth = img[..., 2]
    coords2d = img[..., :2] / (depth[..., None] + 1e-8)
    mask = (depth > 0).astype(jnp.float32)
    cx = coords2d[..., 0] / (IMG_NORM - 1) * 2 - 1
    cy = coords2d[..., 1] / (IMG_NORM - 1) * 2 - 1
    coords = jnp.stack([cx, cy], axis=-1)
    return coords, mask


def _bilinear_gather_weighted(feat, coords, mask, H, W, XY, Z):
    """4-corner gather for grid_sample(align_corners=True, padding_mode='zeros')
    with the bilinear / in-bounds / visibility / multi-view-normalization
    weights pre-multiplied into the gathered features (keeps the Pallas fuse
    kernel free of width-1 lane slices).

    Returns gw: (B, V*4, Z, XY, C), z-major so the kernel's vertical max-pool
    reduces over a leading axis.
    """
    B, V, HW, C = feat.shape
    ix = (coords[..., 0] + 1.0) * 0.5 * (W - 1)      # align_corners=True
    iy = (coords[..., 1] + 1.0) * 0.5 * (H - 1)
    x0 = jnp.floor(ix)
    y0 = jnp.floor(iy)
    x1 = x0 + 1.0
    y1 = y0 + 1.0
    wx1 = ix - x0
    wx0 = 1.0 - wx1
    wy1 = iy - y0
    wy0 = 1.0 - wy1
    denom = 1.0 / (jnp.sum(mask, axis=1, keepdims=True) + 1e-8)       # (B,1,P)

    parts = []
    for cx, cy, cw in ((x0, y0, wx0 * wy0), (x1, y0, wx1 * wy0),
                       (x0, y1, wx0 * wy1), (x1, y1, wx1 * wy1)):
        inb = ((cx >= 0) & (cx <= W - 1) & (cy >= 0) & (cy <= H - 1)
               ).astype(jnp.float32)
        xi = jnp.clip(cx, 0, W - 1).astype(jnp.int32)
        yi = jnp.clip(cy, 0, H - 1).astype(jnp.int32)
        idx = yi * W + xi                                             # (B,V,P)
        # TODO(synk): dynamic row gather kept in XLA; Pallas/Mosaic gather
        # lowering does not robustly support take-along-sublane with
        # mismatched source/output row counts.
        g = jnp.take_along_axis(feat, idx[..., None], axis=2)         # (B,V,P,C)
        wgt = cw * inb * mask * denom                                 # (B,V,P)
        parts.append(g * wgt[..., None])
    gw = jnp.stack(parts, axis=2)                                     # (B,V,4,P,C)
    gw = gw.reshape(B, V * 4, XY, Z, C).transpose(0, 1, 3, 2, 4)      # (B,V4,Z,XY,C)
    return gw


# ----------------------------- encoders -------------------------------------
def ground_encoder_forward(gp, ugv_images, camera_poses, intrinsics, grid_points_3d):
    B, V, C, H, W = ugv_images.shape
    _, X, Y, Z, _ = grid_points_3d.shape
    XY = X * Y
    tokens = vit_forward(gp["vit"], ugv_images.reshape(B * V, C, H, W))
    patches = tokens[:, 1:, :]                                        # drop cls
    Hf, Wf = H // PATCH, W // PATCH
    D = patches.shape[-1]
    feat = patches.reshape(B, V, Hf * Wf, D)                          # (B,V,HW,C)

    coords, mask = project_points(grid_points_3d, camera_poses, intrinsics)
    gw = _bilinear_gather_weighted(feat, coords, mask, Hf, Wf, XY, Z)

    # fused: multi-view combine + fc1(relu) + fc2 + max over Z, one grid step
    bev_flat = pallas_fuse_mlp_pool(gw, gp["fc1_w"], gp["fc1_b"],
                                    gp["fc2_w"], gp["fc2_b"])         # (B,XY,Cf)
    bev = bev_flat.reshape(B, X, Y, -1).transpose(0, 3, 1, 2)         # (B,Cf,X,Y)
    return bev


def overhead_encoder_forward(op, uav_image):
    B, C, H, W = uav_image.shape
    tokens = vit_forward(op["vit"], uav_image)
    patches = tokens[:, 1:, :]
    Hf, Wf = H // PATCH, W // PATCH
    D = patches.shape[-1]
    out = pallas_linear(patches.reshape(B * Hf * Wf, D), op["proj_w"], op["proj_b"])
    Cf = out.shape[-1]
    return out.reshape(B, Hf, Wf, Cf).transpose(0, 3, 1, 2)           # (B,Cf,Hf,Wf)


def snapvit_forward(params, ugv_data, uav_data):
    ground_bev = ground_encoder_forward(params["ground"], **ugv_data)
    overhead_bev = overhead_encoder_forward(params["overhead"], **uav_data)
    return ground_bev, overhead_bev


# ----------------------------- param init -----------------------------------
def _linear_params(key, fan_in, fan_out):
    w = 0.02 * jax.random.normal(key, (fan_in, fan_out), jnp.float32)
    b = jnp.zeros((fan_out,), jnp.float32)
    return w, b


def init_vit_params(key, in_ch, num_patches):
    D = EMBED_DIM
    ks = jax.random.split(key, 8 + 6 * DEPTH)
    patch_w, patch_b = _linear_params(ks[0], in_ch * PATCH * PATCH, D)
    cls = 0.02 * jax.random.normal(ks[1], (1, 1, D), jnp.float32)
    pos = 0.02 * jax.random.normal(ks[2], (1, num_patches + 1, D), jnp.float32)
    blocks = []
    for d in range(DEPTH):
        kq, kp, k1, k2 = ks[3 + 4 * d: 7 + 4 * d]
        qkv_w, qkv_b = _linear_params(kq, D, 3 * D)
        proj_w, proj_b = _linear_params(kp, D, D)
        fc1_w, fc1_b = _linear_params(k1, D, MLP_RATIO * D)
        fc2_w, fc2_b = _linear_params(k2, MLP_RATIO * D, D)
        blocks.append(dict(
            ln1_g=jnp.ones((D,)), ln1_b=jnp.zeros((D,)),
            qkv_w=qkv_w, qkv_b=qkv_b, proj_w=proj_w, proj_b=proj_b,
            ln2_g=jnp.ones((D,)), ln2_b=jnp.zeros((D,)),
            fc1_w=fc1_w, fc1_b=fc1_b, fc2_w=fc2_w, fc2_b=fc2_b))
    return dict(patch_w=patch_w, patch_b=patch_b, cls=cls, pos=pos, blocks=blocks,
                norm_g=jnp.ones((D,)), norm_b=jnp.zeros((D,)))


def init_params(key, num_patches):
    kg, ko, k1, k2, k3 = jax.random.split(key, 5)
    fc1_w, fc1_b = _linear_params(k1, EMBED_DIM, FUSION_HIDDEN)
    fc2_w, fc2_b = _linear_params(k2, FUSION_HIDDEN, FEATURE_DIM)
    proj_w, proj_b = _linear_params(k3, EMBED_DIM, FEATURE_DIM)
    return dict(
        ground=dict(vit=init_vit_params(kg, 3, num_patches),
                    fc1_w=fc1_w, fc1_b=fc1_b, fc2_w=fc2_w, fc2_b=fc2_b),
        overhead=dict(vit=init_vit_params(ko, 3, num_patches),
                      proj_w=proj_w, proj_b=proj_b),
        temperature=jnp.float32(0.07),   # defined in module, unused in forward
    )


# ----------------------------- main ------------------------------------------
if __name__ == "__main__":
    B, V = 2, 2
    H = W = 32                       # 2x2 patches of size 16
    X = Y = Z = 4                    # 64 grid points
    num_patches = (H // PATCH) * (W // PATCH)

    key = jax.random.PRNGKey(0)
    kparam, kimg, kuav = jax.random.split(key, 3)
    params = init_params(kparam, num_patches)

    ugv_images = jax.random.normal(kimg, (B, V, 3, H, W), jnp.float32)
    uav_image = jax.random.normal(kuav, (B, 3, H, W), jnp.float32)

    xs = jnp.linspace(-2.0, 2.0, X)
    ys = jnp.linspace(-2.0, 2.0, Y)
    zs = jnp.linspace(0.0, 2.0, Z)
    gx, gy, gz = jnp.meshgrid(xs, ys, zs, indexing="ij")
    grid_points_3d = jnp.broadcast_to(
        jnp.stack([gx, gy, gz], axis=-1)[None], (B, X, Y, Z, 3)).astype(jnp.float32)

    poses = jnp.zeros((B, V, 4, 4), jnp.float32)
    for b in range(B):
        for v in range(V):
            t = jnp.array([0.3 * v - 0.2 * b, 0.1 * b, 5.0 + 0.5 * v], jnp.float32)
            m = jnp.eye(4, dtype=jnp.float32).at[:3, 3].set(t)
            poses = poses.at[b, v].set(m)

    intrinsics = jnp.broadcast_to(
        jnp.array([[100.0, 0.0, 112.0],
                   [0.0, 100.0, 112.0],
                   [0.0, 0.0, 1.0]], jnp.float32), (B, V, 3, 3))

    ugv_data = dict(ugv_images=ugv_images, camera_poses=poses,
                    intrinsics=intrinsics, grid_points_3d=grid_points_3d)
    uav_data = dict(uav_image=uav_image)

    ground_bev, overhead_bev = snapvit_forward(params, ugv_data, uav_data)
    jax.block_until_ready((ground_bev, overhead_bev))

    assert ground_bev.shape == (B, FEATURE_DIM, X, Y)
    assert overhead_bev.shape == (B, FEATURE_DIM, H // PATCH, W // PATCH)
    print("KERNEL_OK")
</pallas_src>

<mosaic_0001>
module attributes {stable_mosaic.version = 11 : i64} {
  func.func @_linear_kernel(%arg0: i32, %arg1: memref<16x768xf32, #tpu.memory_space<vmem>>, %arg2: memref<768x32xf32, #tpu.memory_space<vmem>>, %arg3: memref<1x32xf32, #tpu.memory_space<vmem>>, %arg4: memref<16x32xf32, #tpu.memory_space<vmem>>) attributes {dimension_semantics = [#tpu.dimension_semantics<parallel>], iteration_bounds = array<i64: 1>, scalar_prefetch = 0 : i64, scratch_operands = 0 : i64, tpu.core_type = #tpu.core_type<tc>, window_params = [{transform_indices = @transform_0, window_bounds = array<i64: 16, 768>}, {pipeline_mode = #tpu.pipeline_mode<synchronous>, transform_indices = @transform_1, window_bounds = array<i64: 768, 32>}, {pipeline_mode = #tpu.pipeline_mode<synchronous>, transform_indices = @transform_2, window_bounds = array<i64: 1, 32>}, {transform_indices = @transform_3, window_bounds = array<i64: 16, 32>}]} {
    %c0 = arith.constant 0 : index
    %c0_0 = arith.constant 0 : index
    %0 = vector.load %arg1[%c0, %c0_0] : memref<16x768xf32, #tpu.memory_space<vmem>>, vector<16x768xf32>
    %c0_1 = arith.constant 0 : index
    %c0_2 = arith.constant 0 : index
    %1 = vector.load %arg2[%c0_1, %c0_2] : memref<768x32xf32, #tpu.memory_space<vmem>>, vector<768x32xf32>
    %cst = arith.constant dense<0.000000e+00> : vector<16x32xf32>
    %2 = tpu.matmul %0, %1, %cst {dimension_numbers = #tpu.dot_dimension_numbers<[1], [0], [0], [1], [0, 0, 1, 1], [], []>} : vector<16x768xf32>, vector<768x32xf32>, vector<16x32xf32> -> vector<16x32xf32>
    %c0_3 = arith.constant 0 : index
    %c0_4 = arith.constant 0 : index
    %3 = vector.load %arg3[%c0_3, %c0_4] : memref<1x32xf32, #tpu.memory_space<vmem>>, vector<1x32xf32>
    %4 = vector.broadcast %3 : vector<1x32xf32> to vector<16x32xf32>
    %5 = arith.addf %2, %4 : vector<16x32xf32>
    %c0_5 = arith.constant 0 : index
    %c0_6 = arith.constant 0 : index
    %6 = vector.load %arg4[%c0_5, %c0_6] : memref<16x32xf32, #tpu.memory_space<vmem>>, vector<16x32xf32>
    tpu.vector_store %arg4[%c0_5, %c0_6], %5 {strides = array<i32>} : memref<16x32xf32, #tpu.memory_space<vmem>>, vector<16x32xf32>,
    return
  }
  func.func @transform_0(%arg0: i32) -> (i32, i32) {
    %c0_i32 = arith.constant 0 : i32
    %c0_i32_0 = arith.constant 0 : i32
    return %arg0, %c0_i32 : i32, i32
  }
  func.func @transform_1(%arg0: i32) -> (i32, i32) {
    %c0_i32 = arith.constant 0 : i32
    %c0_i32_0 = arith.constant 0 : i32
    %c0_i32_1 = arith.constant 0 : i32
    return %c0_i32, %c0_i32_0 : i32, i32
  }
  func.func @transform_2(%arg0: i32) -> (i32, i32) {
    %c0_i32 = arith.constant 0 : i32
    %c0_i32_0 = arith.constant 0 : i32
    %c0_i32_1 = arith.constant 0 : i32
    return %c0_i32, %c0_i32_0 : i32, i32
  }
  func.func @transform_3(%arg0: i32) -> (i32, i32) {
    %c0_i32 = arith.constant 0 : i32
    %c0_i32_0 = arith.constant 0 : i32
    return %arg0, %c0_i32 : i32, i32
  }
}

</mosaic_0001>

<llo_original>
// kernel: tpu_custom_call.1
$region0: #{tpu_custom_call.1}
  #allocation0 [shape = 'u32[]', space=smem, size = 0x4, offset = 0x4, fixed_abs, tag = 'smem constant byte address 0x4 - core index']
  #allocation1 [shape = 'u32[144,128]{1,0:T(1,128)}', space=vmem, size = 0x12000, scoped, tag = 'internal scratch']
  %s0 = inlined_call_operand.vmem [shape: f32[16,768], index: 0, kind: input, shape index: {}]
  %s1 = inlined_call_operand.vmem [shape: f32[768,32], index: 1, kind: input, shape index: {}]
  %s2 = inlined_call_operand.vmem [shape: f32[1,32], index: 2, kind: input, shape index: {}]
  %s3 = inlined_call_operand.hbm [shape: f32[16,32], index: 3, kind: output, shape index: {}]
  %s4 = sld [smem:[#allocation0]]
  $region22: #{tpu_custom_call.1} parent=0
    _
  %s6 = ssub.s32 1, %s4
  %s7 = scalar_select 0, %s6, %s4
  $region1: #{tpu_custom_call.1} parent=0
    #allocation2 [shape = 'u8[8192]{0}', space=vmem, size = 0x2000, scoped, tag = 'output window, operand 0, single buffered']
    #allocation3 [shape = 's32[1]{0}', space=sflag, size = 0x4, scoped, tag = 'scoped memory for tpu_custom_call.1']
    %8 = vsyncpa [#allocation3], 0
    // Predicated region
    $region2: #{tpu_custom_call.1} parent=1 // pred_check
      _
    $region3: #{tpu_custom_call.1} parent=1 // pred_check_branch
      %10 = sbr.rel (0) target = $region5
    $region4: #{tpu_custom_call.1} parent=1 // pred_region
      _
    $region5: #{tpu_custom_call.1} parent=1 // pred_fallthru
      _
    // Predicated region
    $region6: #{tpu_custom_call.1} parent=1 // pred_check
      _
    $region7: #{tpu_custom_call.1} parent=1 // pred_check_branch
      %12 = sbr.rel (0) target = $region9
    $region8: #{tpu_custom_call.1} parent=1 // pred_region
      _
    $region9: #{tpu_custom_call.1} parent=1 // pred_fallthru
      _
    // Predicated region
    $region10: #{tpu_custom_call.1} parent=1 // pred_check
      _
    $region11: #{tpu_custom_call.1} parent=1 // pred_check_branch
      %14 = sbr.rel (0) target = $region13
    $region12: #{tpu_custom_call.1} parent=1 // pred_region
      _
    $region13: #{tpu_custom_call.1} parent=1 // pred_fallthru
      _
    %v15 = vld [vmem:[%s0] sm:$0xff]
    %v16 = vld [vmem:[%s0 + $0x8] sm:$0xff]
    %v17 = vld [vmem:[%s0 + $0x10] sm:$0xff]
    %v18 = vld [vmem:[%s0 + $0x18] sm:$0xff]
    %v19 = vld [vmem:[%s0 + $0x20] sm:$0xff]
    %v20 = vld [vmem:[%s0 + $0x28] sm:$0xff]
    %v21 = vld [vmem:[%s0 + $0x30] sm:$0xff]
    %v22 = vld [vmem:[%s0 + $0x38] sm:$0xff]
    %v23 = vld [vmem:[%s0 + $0x40] sm:$0xff]
    %v24 = vld [vmem:[%s0 + $0x48] sm:$0xff]
    %v25 = vld [vmem:[%s0 + $0x50] sm:$0xff]
    %v26 = vld [vmem:[%s0 + $0x58] sm:$0xff]
    %v27 = vld [vmem:[%s1] sm:$0xff]
    %v28 = vld [vmem:[%s1 + $0x8] sm:$0xff]
    %v29 = vld [vmem:[%s1 + $0x10] sm:$0xff]
    %v30 = vld [vmem:[%s1 + $0x18] sm:$0xff]
    %v31 = vld [vmem:[%s1 + $0x20] sm:$0xff]
    %v32 = vld [vmem:[%s1 + $0x28] sm:$0xff]
    %v33 = vld [vmem:[%s1 + $0x30] sm:$0xff]
    %v34 = vld [vmem:[%s1 + $0x38] sm:$0xff]
    %v35 = vld [vmem:[%s1 + $0x40] sm:$0xff]
    %v36 = vld [vmem:[%s1 + $0x48] sm:$0xff]
    %v37 = vld [vmem:[%s1 + $0x50] sm:$0xff]
    %v38 = vld [vmem:[%s1 + $0x58] sm:$0xff]
    %v39 = vld [vmem:[%s1 + $0x60] sm:$0xff]
    %v40 = vld [vmem:[%s1 + $0x68] sm:$0xff]
    %v41 = vld [vmem:[%s1 + $0x70] sm:$0xff]
    %v42 = vld [vmem:[%s1 + $0x78] sm:$0xff]
    %v43 = vld [vmem:[%s1 + $0x80] sm:$0xff]
    %v44 = vld [vmem:[%s1 + $0x88] sm:$0xff]
    %v45 = vld [vmem:[%s1 + $0x90] sm:$0xff]
    %v46 = vld [vmem:[%s1 + $0x98] sm:$0xff]
    %v47 = vld [vmem:[%s1 + $0xa0] sm:$0xff]
    %v48 = vld [vmem:[%s1 + $0xa8] sm:$0xff]
    %v49 = vld [vmem:[%s1 + $0xb0] sm:$0xff]
    %v50 = vld [vmem:[%s1 + $0xb8] sm:$0xff]
    %v51 = vld [vmem:[%s1 + $0xc0] sm:$0xff]
    %v52 = vld [vmem:[%s1 + $0xc8] sm:$0xff]
    %v53 = vld [vmem:[%s1 + $0xd0] sm:$0xff]
    %v54 = vld [vmem:[%s1 + $0xd8] sm:$0xff]
    %v55 = vld [vmem:[%s1 + $0xe0] sm:$0xff]
    %v56 = vld [vmem:[%s1 + $0xe8] sm:$0xff]
    %v57 = vld [vmem:[%s1 + $0xf0] sm:$0xff]
    %v58 = vld [vmem:[%s1 + $0xf8] sm:$0xff]
    %v59 = vld [vmem:[%s1 + $0x100] sm:$0xff]
    %v60 = vld [vmem:[%s1 + $0x108] sm:$0xff]
    %v61 = vld [vmem:[%s1 + $0x110] sm:$0xff]
    %v62 = vld [vmem:[%s1 + $0x118] sm:$0xff]
    %v63 = vld [vmem:[%s1 + $0x120] sm:$0xff]
    %v64 = vld [vmem:[%s1 + $0x128] sm:$0xff]
    %v65 = vld [vmem:[%s1 + $0x130] sm:$0xff]
    %v66 = vld [vmem:[%s1 + $0x138] sm:$0xff]
    %v67 = vld [vmem:[%s1 + $0x140] sm:$0xff]
    %v68 = vld [vmem:[%s1 + $0x148] sm:$0xff]
    %v69 = vld [vmem:[%s1 + $0x150] sm:$0xff]
    %v70 = vld [vmem:[%s1 + $0x158] sm:$0xff]
    %v71 = vld [vmem:[%s1 + $0x160] sm:$0xff]
    %v72 = vld [vmem:[%s1 + $0x168] sm:$0xff]
    %v73 = vld [vmem:[%s1 + $0x170] sm:$0xff]
    %v74 = vld [vmem:[%s1 + $0x178] sm:$0xff]
    %v75 = vld [vmem:[%s1 + $0x180] sm:$0xff]
    %v76 = vld [vmem:[%s1 + $0x188] sm:$0xff]
    %v77 = vld [vmem:[%s1 + $0x190] sm:$0xff]
    %v78 = vld [vmem:[%s1 + $0x198] sm:$0xff]
    %v79 = vld [vmem:[%s1 + $0x1a0] sm:$0xff]
    %v80 = vld [vmem:[%s1 + $0x1a8] sm:$0xff]
    %v81 = vld [vmem:[%s1 + $0x1b0] sm:$0xff]
    %v82 = vld [vmem:[%s1 + $0x1b8] sm:$0xff]
    %v83 = vld [vmem:[%s1 + $0x1c0] sm:$0xff]
    %v84 = vld [vmem:[%s1 + $0x1c8] sm:$0xff]
    %v85 = vld [vmem:[%s1 + $0x1d0] sm:$0xff]
    %v86 = vld [vmem:[%s1 + $0x1d8] sm:$0xff]
    %v87 = vld [vmem:[%s1 + $0x1e0] sm:$0xff]
    %v88 = vld [vmem:[%s1 + $0x1e8] sm:$0xff]
    %v89 = vld [vmem:[%s1 + $0x1f0] sm:$0xff]
    %v90 = vld [vmem:[%s1 + $0x1f8] sm:$0xff]
    %v91 = vld [vmem:[%s1 + $0x200] sm:$0xff]
    %v92 = vld [vmem:[%s1 + $0x208] sm:$0xff]
    %v93 = vld [vmem:[%s1 + $0x210] sm:$0xff]
    %v94 = vld [vmem:[%s1 + $0x218] sm:$0xff]
    %v95 = vld [vmem:[%s1 + $0x220] sm:$0xff]
    %v96 = vld [vmem:[%s1 + $0x228] sm:$0xff]
    %v97 = vld [vmem:[%s1 + $0x230] sm:$0xff]
    %v98 = vld [vmem:[%s1 + $0x238] sm:$0xff]
    %v99 = vld [vmem:[%s1 + $0x240] sm:$0xff]
    %v100 = vld [vmem:[%s1 + $0x248] sm:$0xff]
    %v101 = vld [vmem:[%s1 + $0x250] sm:$0xff]
    %v102 = vld [vmem:[%s1 + $0x258] sm:$0xff]
    %v103 = vld [vmem:[%s1 + $0x260] sm:$0xff]
    %v104 = vld [vmem:[%s1 + $0x268] sm:$0xff]
    %v105 = vld [vmem:[%s1 + $0x270] sm:$0xff]
    %v106 = vld [vmem:[%s1 + $0x278] sm:$0xff]
    %v107 = vld [vmem:[%s1 + $0x280] sm:$0xff]
    %v108 = vld [vmem:[%s1 + $0x288] sm:$0xff]
    %v109 = vld [vmem:[%s1 + $0x290] sm:$0xff]
    %v110 = vld [vmem:[%s1 + $0x298] sm:$0xff]
    %v111 = vld [vmem:[%s1 + $0x2a0] sm:$0xff]
    %v112 = vld [vmem:[%s1 + $0x2a8] sm:$0xff]
    %v113 = vld [vmem:[%s1 + $0x2b0] sm:$0xff]
    %v114 = vld [vmem:[%s1 + $0x2b8] sm:$0xff]
    %v115 = vld [vmem:[%s1 + $0x2c0] sm:$0xff]
    %v116 = vld [vmem:[%s1 + $0x2c8] sm:$0xff]
    %v117 = vld [vmem:[%s1 + $0x2d0] sm:$0xff]
    %v118 = vld [vmem:[%s1 + $0x2d8] sm:$0xff]
    %v119 = vld [vmem:[%s1 + $0x2e0] sm:$0xff]
    %v120 = vld [vmem:[%s1 + $0x2e8] sm:$0xff]
    %v121 = vld [vmem:[%s1 + $0x2f0] sm:$0xff]
    %v122 = vld [vmem:[%s1 + $0x2f8] sm:$0xff]
    %v123 = vld [vmem:[%s2] sm:$0x1]
    %v125 = vlaneseq
    %v126 = vshrl.u32 %v125, 7
    %v127 = vsub.s32 0, %v126
    %v128 = vrot.slane %v123, %v127
    %130 = vmatprep.subr.mxu0 0.0
    %131 = vmatpush1.msra.mxu0 %v27
    %132 = vmatprep.subr.mxu0 0.0
    %133 = vmatpush1.msra.mxu0 %v28
    %134 = vmatprep.subr.mxu0 0.0
    %135 = vmatpush1.msra.mxu0 %v29
    %136 = vmatprep.subr.mxu0 0.0
    %137 = vmatpush1.msra.mxu0 %v30
    %138 = vmatprep.subr.mxu0 0.0
    %139 = vmatpush1.msra.mxu0 %v31
    %140 = vmatprep.subr.mxu0 0.0
    %141 = vmatpush1.msra.mxu0 %v32
    %142 = vmatprep.subr.mxu0 0.0
    %143 = vmatpush1.msra.mxu0 %v33
    %144 = vmatprep.subr.mxu0 0.0
    %145 = vmatpush1.msra.mxu0 %v34
    %146 = vmatprep.subr.mxu0 0.0
    %147 = vmatpush1.msra.mxu0 %v35
    %148 = vmatprep.subr.mxu0 0.0
    %149 = vmatpush1.msra.mxu0 %v36
    %150 = vmatprep.subr.mxu0 0.0
    %151 = vmatpush1.msra.mxu0 %v37
    %152 = vmatprep.subr.mxu0 0.0
    %153 = vmatpush1.msra.mxu0 %v38
    %154 = vmatprep.subr.mxu0 0.0
    %155 = vmatpush1.msra.mxu0 %v39
    %156 = vmatprep.subr.mxu0 0.0
    %157 = vmatpush1.msra.mxu0 %v40
    %158 = vmatprep.subr.mxu0 0.0
    %159 = vmatpush1.msra.mxu0 %v41
    %160 = vmatprep.subr.mxu0 0.0
    %161 = vmatpush1.msra.mxu0 %v42
    %162 = vmatprep.subr.mxu0 0.0
    %163 = vmatpush1.msra.mxu0 %v43
    %164 = vmatprep.subr.mxu0 0.0
    %165 = vmatpush1.msra.mxu0 %v44
    %166 = vmatprep.subr.mxu0 0.0
    %167 = vmatpush1.msra.mxu0 %v45
    %168 = vmatprep.subr.mxu0 0.0
    %169 = vmatpush1.msra.mxu0 %v46
    %170 = vmatprep.subr.mxu0 0.0
    %171 = vmatpush1.msra.mxu0 %v47
    %172 = vmatprep.subr.mxu0 0.0
    %173 = vmatpush1.msra.mxu0 %v48
    %174 = vmatprep.subr.mxu0 0.0
    %175 = vmatpush1.msra.mxu0 %v49
    %176 = vmatprep.subr.mxu0 0.0
    %177 = vmatpush1.msra.mxu0 %v50
    %178 = vmatprep.subr.mxu0 0.0
    %179 = vmatpush1.msra.mxu0 %v51
    %180 = vmatprep.subr.mxu0 0.0
    %181 = vmatpush1.msra.mxu0 %v52
    %182 = vmatprep.subr.mxu0 0.0
    %183 = vmatpush1.msra.mxu0 %v53
    %184 = vmatprep.subr.mxu0 0.0
    %185 = vmatpush1.msra.mxu0 %v54
    %186 = vmatprep.subr.mxu0 0.0
    %187 = vmatpush1.msra.mxu0 %v55
    %188 = vmatprep.subr.mxu0 0.0
    %189 = vmatpush1.msra.mxu0 %v56
    %190 = vmatprep.subr.mxu0 0.0
    %191 = vmatpush1.msra.mxu0 %v57
    %192 = vmatprep.subr.mxu0 0.0
    %193 = vmatpush1.msra.mxu0 %v58
    %194 = vmatprep.mubr.f32.mxu0 %v16
    %195 = vmatmul.mubr.f32.gmra.mrb[0].mxu0 %v15
    %v196 = vpop.f32.mrb[0].mxu0
    %v197 = vadd.f32 %v128, %v196
    %v198 = vpop.f32.mrb[0].mxu0
    %199 = vmatprep.mubr.f32.mxu0 %v22
    %200 = vmatmul.mubr.f32.gmra.mrb[0].mxu0 %v21
    %v201 = vpop.f32.mrb[0].mxu0
    %v202 = vadd.f32 %v128, %v201
    %v203 = vpop.f32.mrb[0].mxu0
    %204 = vdwg.mxu0
    %205 = vmatprep.subr.mxu0 0.0
    %206 = vmatpush1.msra.mxu0 %v59
    %207 = vmatprep.subr.mxu0 0.0
    %208 = vmatpush1.msra.mxu0 %v60
    %209 = vmatprep.subr.mxu0 0.0
    %210 = vmatpush1.msra.mxu0 %v61
    %211 = vmatprep.subr.mxu0 0.0
    %212 = vmatpush1.msra.mxu0 %v62
    %213 = vmatprep.subr.mxu0 0.0
    %214 = vmatpush1.msra.mxu0 %v63
    %215 = vmatprep.subr.mxu0 0.0
    %216 = vmatpush1.msra.mxu0 %v64
    %217 = vmatprep.subr.mxu0 0.0
    %218 = vmatpush1.msra.mxu0 %v65
    %219 = vmatprep.subr.mxu0 0.0
    %220 = vmatpush1.msra.mxu0 %v66
    %221 = vmatprep.subr.mxu0 0.0
    %222 = vmatpush1.msra.mxu0 %v67
    %223 = vmatprep.subr.mxu0 0.0
    %224 = vmatpush1.msra.mxu0 %v68
    %225 = vmatprep.subr.mxu0 0.0
    %226 = vmatpush1.msra.mxu0 %v69
    %227 = vmatprep.subr.mxu0 0.0
    %228 = vmatpush1.msra.mxu0 %v70
    %229 = vmatprep.subr.mxu0 0.0
    %230 = vmatpush1.msra.mxu0 %v71
    %231 = vmatprep.subr.mxu0 0.0
    %232 = vmatpush1.msra.mxu0 %v72
    %233 = vmatprep.subr.mxu0 0.0
    %234 = vmatpush1.msra.mxu0 %v73
    %235 = vmatprep.subr.mxu0 0.0
    %236 = vmatpush1.msra.mxu0 %v74
    %237 = vmatprep.subr.mxu0 0.0
    %238 = vmatpush1.msra.mxu0 %v75
    %239 = vmatprep.subr.mxu0 0.0
    %240 = vmatpush1.msra.mxu0 %v76
    %241 = vmatprep.subr.mxu0 0.0
    %242 = vmatpush1.msra.mxu0 %v77
    %243 = vmatprep.subr.mxu0 0.0
    %244 = vmatpush1.msra.mxu0 %v78
    %245 = vmatprep.subr.mxu0 0.0
    %246 = vmatpush1.msra.mxu0 %v79
    %247 = vmatprep.subr.mxu0 0.0
    %248 = vmatpush1.msra.mxu0 %v80
    %249 = vmatprep.subr.mxu0 0.0
    %250 = vmatpush1.msra.mxu0 %v81
    %251 = vmatprep.subr.mxu0 0.0
    %252 = vmatpush1.msra.mxu0 %v82
    %253 = vmatprep.subr.mxu0 0.0
    %254 = vmatpush1.msra.mxu0 %v83
    %255 = vmatprep.subr.mxu0 0.0
    %256 = vmatpush1.msra.mxu0 %v84
    %257 = vmatprep.subr.mxu0 0.0
    %258 = vmatpush1.msra.mxu0 %v85
    %259 = vmatprep.subr.mxu0 0.0
    %260 = vmatpush1.msra.mxu0 %v86
    %261 = vmatprep.subr.mxu0 0.0
    %262 = vmatpush1.msra.mxu0 %v87
    %263 = vmatprep.subr.mxu0 0.0
    %264 = vmatpush1.msra.mxu0 %v88
    %265 = vmatprep.subr.mxu0 0.0
    %266 = vmatpush1.msra.mxu0 %v89
    %267 = vmatprep.subr.mxu0 0.0
    %268 = vmatpush1.msra.mxu0 %v90
    %269 = vmatprep.mubr.f32.mxu0 %v18
    %270 = vmatmul.mubr.f32.gmra.mrb[0].mxu0 %v17
    %v271 = vpop.f32.mrb[0].mxu0
    %v272 = vadd.f32 %v197, %v271
    %v273 = vpop.f32.mrb[0].mxu0
    %274 = vmatprep.mubr.f32.mxu0 %v24
    %275 = vmatmul.mubr.f32.gmra.mrb[0].mxu0 %v23
    %v276 = vpop.f32.mrb[0].mxu0
    %v277 = vadd.f32 %v202, %v276
    %v278 = vpop.f32.mrb[0].mxu0
    %279 = vdwg.mxu0
    %280 = vmatprep.subr.mxu0 0.0
    %281 = vmatpush1.msra.mxu0 %v91
    %282 = vmatprep.subr.mxu0 0.0
    %283 = vmatpush1.msra.mxu0 %v92
    %284 = vmatprep.subr.mxu0 0.0
    %285 = vmatpush1.msra.mxu0 %v93
    %286 = vmatprep.subr.mxu0 0.0
    %287 = vmatpush1.msra.mxu0 %v94
    %288 = vmatprep.subr.mxu0 0.0
    %289 = vmatpush1.msra.mxu0 %v95
    %290 = vmatprep.subr.mxu0 0.0
    %291 = vmatpush1.msra.mxu0 %v96
    %292 = vmatprep.subr.mxu0 0.0
    %293 = vmatpush1.msra.mxu0 %v97
    %294 = vmatprep.subr.mxu0 0.0
    %295 = vmatpush1.msra.mxu0 %v98
    %296 = vmatprep.subr.mxu0 0.0
    %297 = vmatpush1.msra.mxu0 %v99
    %298 = vmatprep.subr.mxu0 0.0
    %299 = vmatpush1.msra.mxu0 %v100
    %300 = vmatprep.subr.mxu0 0.0
    %301 = vmatpush1.msra.mxu0 %v101
    %302 = vmatprep.subr.mxu0 0.0
    %303 = vmatpush1.msra.mxu0 %v102
    %304 = vmatprep.subr.mxu0 0.0
    %305 = vmatpush1.msra.mxu0 %v103
    %306 = vmatprep.subr.mxu0 0.0
    %307 = vmatpush1.msra.mxu0 %v104
    %308 = vmatprep.subr.mxu0 0.0
    %309 = vmatpush1.msra.mxu0 %v105
    %310 = vmatprep.subr.mxu0 0.0
    %311 = vmatpush1.msra.mxu0 %v106
    %312 = vmatprep.subr.mxu0 0.0
    %313 = vmatpush1.msra.mxu0 %v107
    %314 = vmatprep.subr.mxu0 0.0
    %315 = vmatpush1.msra.mxu0 %v108
    %316 = vmatprep.subr.mxu0 0.0
    %317 = vmatpush1.msra.mxu0 %v109
    %318 = vmatprep.subr.mxu0 0.0
    %319 = vmatpush1.msra.mxu0 %v110
    %320 = vmatprep.subr.mxu0 0.0
    %321 = vmatpush1.msra.mxu0 %v111
    %322 = vmatprep.subr.mxu0 0.0
    %323 = vmatpush1.msra.mxu0 %v112
    %324 = vmatprep.subr.mxu0 0.0
    %325 = vmatpush1.msra.mxu0 %v113
    %326 = vmatprep.subr.mxu0 0.0
    %327 = vmatpush1.msra.mxu0 %v114
    %328 = vmatprep.subr.mxu0 0.0
    %329 = vmatpush1.msra.mxu0 %v115
    %330 = vmatprep.subr.mxu0 0.0
    %331 = vmatpush1.msra.mxu0 %v116
    %332 = vmatprep.subr.mxu0 0.0
    %333 = vmatpush1.msra.mxu0 %v117
    %334 = vmatprep.subr.mxu0 0.0
    %335 = vmatpush1.msra.mxu0 %v118
    %336 = vmatprep.subr.mxu0 0.0
    %337 = vmatpush1.msra.mxu0 %v119
    %338 = vmatprep.subr.mxu0 0.0
    %339 = vmatpush1.msra.mxu0 %v120
    %340 = vmatprep.subr.mxu0 0.0
    %341 = vmatpush1.msra.mxu0 %v121
    %342 = vmatprep.subr.mxu0 0.0
    %343 = vmatpush1.msra.mxu0 %v122
    %344 = vmatprep.mubr.f32.mxu0 %v20
    %345 = vmatmul.mubr.f32.gmra.mrb[0].mxu0 %v19
    %v346 = vpop.f32.mrb[0].mxu0
    %v347 = vadd.f32 %v272, %v346
    %v348 = vpop.f32.mrb[0].mxu0
    %349 = vmatprep.mubr.f32.mxu0 %v26
    %350 = vmatmul.mubr.f32.gmra.mrb[0].mxu0 %v25
    %v351 = vpop.f32.mrb[0].mxu0
    %v352 = vadd.f32 %v277, %v351
    %v353 = vpop.f32.mrb[0].mxu0
    %354 = vdwg.mxu0
    %vm355 = vcmask 261120
    %356 = vst.msk [vmem:[#allocation2] sm:$0xff] %vm355, %v347
    %357 = vst.msk [vmem:[#allocation2 + $0x8] sm:$0xff] %vm355, %v352
    // Predicated region
    $region14: #{tpu_custom_call.1} parent=1 // pred_check
      _
    $region15: #{tpu_custom_call.1} parent=1 // pred_check_branch
      %359 = sbr.rel (0) target = $region17
    $region16: #{tpu_custom_call.1} parent=1 // pred_region
      %s361 = ssub.s32 256, 256
      %362 = vsyncadd [#allocation3], %s361
      %s363 = sshll.u32 [#allocation2], 4
      %s364 = int_to_ptr.vmem [resolvable:$true] %s363
      %369 = dma.vmem_to_hbm [thread:$0]  %s364, 256, %s3, [#allocation3], 128, 128, 8
    $region17: #{tpu_custom_call.1} parent=1 // pred_fallthru
      _
    // Predicated region
    $region18: #{tpu_custom_call.1} parent=1 // pred_check
      _
    $region19: #{tpu_custom_call.1} parent=1 // pred_check_branch
      %371 = sbr.rel (0) target = $region21
    $region20: #{tpu_custom_call.1} parent=1 // pred_region
      %372 = dma.done [#allocation3], 256
    $region21: #{tpu_custom_call.1} parent=1 // pred_fallthru
      _
    %373 = vsyncpa [#allocation3], 1

</llo_original>
